<compile_context>
chip_gen: v7x
topology: tpu7x:2x2x1
jax: 0.10.0
libtpu: 0.0.40
codegen_flags: <defaults>
</compile_context>

<pallas_src>
import functools

import jax
import jax.numpy as jnp
from jax.experimental import pallas as pl
from jax.experimental.pallas import tpu as pltpu


# ---------------------------------------------------------------------------
# Pallas kernel: grad_in = -coeff * grad_out  (elementwise, coeff baked in)
# ---------------------------------------------------------------------------
def _neg_scale_kernel(g_ref, o_ref, *, neg_coeff):
    # Multiply in f32 so low-precision (bf16/fp8) grads don't round coeff first
    # (free for f32 inputs; still VPU-slot work hidden under the HBM roofline).
    o_ref[...] = (g_ref[...].astype(jnp.float32) * neg_coeff).astype(o_ref.dtype)


# ---------------------------------------------------------------------------
# Wrapper: flatten grad to a wide lane-dense slab, run kernel, reshape back.
# ---------------------------------------------------------------------------
_LANE_CHOICES = (512, 256, 128)          # wide lane dim -> unmasked full-width vst
_TARGET_BLOCK_BYTES = 2 * 1024 * 1024    # ~2 MiB/block; 2 bufs x (in+out) ~ 8 MiB
                                         # fits v5e/v6e/v7x scoped VMEM comfortably


def _sublane_multiple(dtype):
    # Native sublane packing: 8 for 32-bit, 16 for 16-bit, 32 for 8-bit dtypes.
    return max(8, 32 // jnp.dtype(dtype).itemsize)


def _run_neg_scale(g, coeff):
    orig_shape, orig_dtype = g.shape, g.dtype
    flat = g.reshape(-1)
    n = flat.shape[0]
    if n == 0:
        return g  # nothing to do for empty grads

    # Lane-dense slab: last dim a wide multiple of 128; pad only if necessary.
    lanes = next((l for l in _LANE_CHOICES if n % l == 0), None)
    pad = 0
    if lanes is None:
        lanes = 128
        pad = (-n) % lanes
        flat = jnp.pad(flat, (0, pad))
    rows = (n + pad) // lanes
    slab = flat.reshape(rows, lanes)

    itemsize = jnp.dtype(orig_dtype).itemsize
    if rows * lanes * itemsize <= _TARGET_BLOCK_BYTES:
        # Whole array in one block: no (8,128) divisibility constraint, one DMA.
        row_tile = rows
    else:
        sub = _sublane_multiple(orig_dtype)
        row_tile = max(sub,
                       (_TARGET_BLOCK_BYTES // (lanes * itemsize)) // sub * sub)
    grid = (pl.cdiv(rows, row_tile),)

    kernel = functools.partial(_neg_scale_kernel, neg_coeff=float(-coeff))
    out = pl.pallas_call(
        kernel,
        out_shape=jax.ShapeDtypeStruct(slab.shape, slab.dtype),
        grid=grid,
        in_specs=[pl.BlockSpec((row_tile, lanes), lambda i: (i, 0))],
        out_specs=pl.BlockSpec((row_tile, lanes), lambda i: (i, 0)),
        input_output_aliases={0: 0},  # grad_out buffer is dead after the bwd
        compiler_params=pltpu.CompilerParams(
            dimension_semantics=("parallel",),      # megacore sharding on v7x
            vmem_limit_bytes=32 * 1024 * 1024),     # headroom on v5e's 16 MiB default
    )(slab)

    out = out.reshape(-1)
    if pad:
        out = out[:n]
    return out.reshape(orig_shape)


# ---------------------------------------------------------------------------
# GradientReverseLayer: identity forward (no kernel), -coeff * grad backward.
# NOTE: coeff is a nondiff_argnum -> must be a Python float (retraces if it
# changes), matching the PyTorch usage where coeff is a plain float.
# ---------------------------------------------------------------------------
@functools.partial(jax.custom_vjp, nondiff_argnums=(1,))
def gradient_reverse(x, coeff=1.0):
    return x  # forward is identity: no pallas_call, zero HBM traffic


def _grl_fwd(x, coeff):
    return x, None


def _grl_bwd(coeff, _residuals, g):
    return (_run_neg_scale(g, coeff),)


gradient_reverse.defvjp(_grl_fwd, _grl_bwd)


class GradientReverseLayer:
    """Stateless module matching the PyTorch GradientReverseLayer."""

    def __call__(self, x, coeff=1.0):
        return gradient_reverse(x, coeff)


# ---------------------------------------------------------------------------
if __name__ == "__main__":
    key = jax.random.PRNGKey(0)
    # NCHW input, small shape consistent with a conv feature map.
    x = jax.random.normal(key, (2, 4, 16, 16), dtype=jnp.float32)

    layer = GradientReverseLayer()

    # Forward pass: pure identity (no kernel launched).
    y = jax.block_until_ready(layer(x, 1.0))
    assert y.shape == x.shape and y.dtype == x.dtype
    assert bool(jnp.allclose(y, x)), "forward must be identity"

    # Backward pass: runs the Pallas kernel (grad_in = -coeff * grad_out).
    coeff = 0.5
    grads = jax.grad(lambda a: jnp.sum(gradient_reverse(a, coeff)))(x)
    grads = jax.block_until_ready(grads)
    assert bool(jnp.allclose(grads, -coeff * jnp.ones_like(x))), "backward mismatch"

    # Non-multiple-of-128 size exercises the padded path.
    x2 = jax.random.normal(key, (3, 5, 7), dtype=jnp.float32)
    g2 = jax.grad(lambda a: jnp.sum(gradient_reverse(a, 2.0)))(x2)
    g2 = jax.block_until_ready(g2)
    assert bool(jnp.allclose(g2, -2.0 * jnp.ones_like(x2))), "padded-path mismatch"

    print("KERNEL_OK")
</pallas_src>

<mosaic_0001>
module attributes {stable_mosaic.version = 11 : i64} {
  func.func @_neg_scale_kernel(%arg0: i32, %arg1: memref<4x512xf32, #tpu.memory_space<vmem>>, %arg2: memref<4x512xf32, #tpu.memory_space<vmem>>) attributes {dimension_semantics = [#tpu.dimension_semantics<parallel>], iteration_bounds = array<i64: 1>, scalar_prefetch = 0 : i64, scratch_operands = 0 : i64, tpu.core_type = #tpu.core_type<tc>, window_params = [{transform_indices = @transform_0, window_bounds = array<i64: 4, 512>}, {transform_indices = @transform_1, window_bounds = array<i64: 4, 512>}]} {
    %c0 = arith.constant 0 : index
    %c0_0 = arith.constant 0 : index
    %0 = vector.load %arg1[%c0, %c0_0] : memref<4x512xf32, #tpu.memory_space<vmem>>, vector<4x512xf32>
    %cst = arith.constant -5.000000e-01 : f32
    %1 = vector.broadcast %cst : f32 to vector<4x512xf32>
    %2 = arith.mulf %0, %1 : vector<4x512xf32>
    %c0_1 = arith.constant 0 : index
    %c0_2 = arith.constant 0 : index
    %3 = vector.load %arg2[%c0_1, %c0_2] : memref<4x512xf32, #tpu.memory_space<vmem>>, vector<4x512xf32>
    tpu.vector_store %arg2[%c0_1, %c0_2], %2 {strides = array<i32>} : memref<4x512xf32, #tpu.memory_space<vmem>>, vector<4x512xf32>,
    return
  }
  func.func @transform_0(%arg0: i32) -> (i32, i32) {
    %c0_i32 = arith.constant 0 : i32
    %c0_i32_0 = arith.constant 0 : i32
    return %arg0, %c0_i32 : i32, i32
  }
  func.func @transform_1(%arg0: i32) -> (i32, i32) {
    %c0_i32 = arith.constant 0 : i32
    %c0_i32_0 = arith.constant 0 : i32
    return %arg0, %c0_i32 : i32, i32
  }
}

</mosaic_0001>

<llo_original>
// kernel: tpu_custom_call.1
$region0: #{tpu_custom_call.1}
  #allocation0 [shape = 'u32[]', space=smem, size = 0x4, offset = 0x4, fixed_abs, tag = 'smem constant byte address 0x4 - core index']
  #allocation1 [shape = 'u32[144,128]{1,0:T(1,128)}', space=vmem, size = 0x12000, scoped, tag = 'internal scratch']
  %s0 = inlined_call_operand.hbm [shape: f32[4,512], index: 0, kind: input, shape index: {}, may-alias: {0,1}]
  %s1 = inlined_call_operand.hbm [shape: f32[4,512], index: 1, kind: output, shape index: {}, may-alias: {0,1}]
  %s2 = sld [smem:[#allocation0]]
  $region18: #{tpu_custom_call.1} parent=0
    _
  %s4 = ssub.s32 1, %s2
  %s5 = scalar_select 0, %s4, %s2
  $region1: #{tpu_custom_call.1} parent=0
    #allocation2 [shape = 'u8[8192]{0}', space=vmem, size = 0x2000, scoped, tag = 'input window, operand 0, single buffered']
    #allocation3 [shape = 's32[1]{0}', space=sflag, size = 0x4, scoped, tag = 'scoped memory for tpu_custom_call.1']
    #allocation4 [shape = 's32[1]{0}', space=sflag, size = 0x4, scoped, tag = 'scoped memory for tpu_custom_call.1']
    #allocation5 [shape = 'u8[8192]{0}', space=vmem, size = 0x2000, scoped, tag = 'output window, operand 0, single buffered']
    %6 = vsyncpa [#allocation3], 0
    %7 = vsyncpa [#allocation4], 0
    // Predicated region
    $region2: #{tpu_custom_call.1} parent=1 // pred_check
      _
    $region3: #{tpu_custom_call.1} parent=1 // pred_check_branch
      %9 = sbr.rel (0) target = $region5
    $region4: #{tpu_custom_call.1} parent=1 // pred_region
      %s11 = ssub.s32 256, 256
      %12 = vsyncadd [#allocation3], %s11
      %s14 = sshll.u32 [#allocation2], 4
      %s15 = int_to_ptr.vmem [resolvable:$true] %s14
      %17 = dma.hbm_to_vmem [thread:$0]  %s0, 256, %s15, [#allocation3]
    $region5: #{tpu_custom_call.1} parent=1 // pred_fallthru
      _
    // Predicated region
    $region6: #{tpu_custom_call.1} parent=1 // pred_check
      _
    $region7: #{tpu_custom_call.1} parent=1 // pred_check_branch
      %19 = sbr.rel (0) target = $region9
    $region8: #{tpu_custom_call.1} parent=1 // pred_region
      %20 = dma.done [#allocation3], 256
    $region9: #{tpu_custom_call.1} parent=1 // pred_fallthru
      _
    %v21 = vld [vmem:[#allocation2] sm:$0xff]
    %v22 = vld [vmem:[#allocation2 + $0x8] sm:$0xff]
    %v23 = vmul.f32 %v21, -0.5
    %v24 = vmul.f32 %v22, -0.5
    %25 = vst [vmem:[#allocation5] sm:$0xff] %v23
    %26 = vst [vmem:[#allocation5 + $0x8] sm:$0xff] %v24
    // Predicated region
    $region10: #{tpu_custom_call.1} parent=1 // pred_check
      _
    $region11: #{tpu_custom_call.1} parent=1 // pred_check_branch
      %28 = sbr.rel (0) target = $region13
    $region12: #{tpu_custom_call.1} parent=1 // pred_region
      %s30 = ssub.s32 256, 256
      %31 = vsyncadd [#allocation4], %s30
      %s33 = sshll.u32 [#allocation5], 4
      %s34 = int_to_ptr.vmem [resolvable:$true] %s33
      %36 = dma.vmem_to_hbm [thread:$0]  %s34, 256, %s1, [#allocation4]
    $region13: #{tpu_custom_call.1} parent=1 // pred_fallthru
      _
    // Predicated region
    $region14: #{tpu_custom_call.1} parent=1 // pred_check
      _
    $region15: #{tpu_custom_call.1} parent=1 // pred_check_branch
      %38 = sbr.rel (0) target = $region17
    $region16: #{tpu_custom_call.1} parent=1 // pred_region
      %39 = dma.done [#allocation4], 256
    $region17: #{tpu_custom_call.1} parent=1 // pred_fallthru
      _
    %40 = vsyncpa [#allocation3], 1
    %41 = vsyncpa [#allocation4], 1

</llo_original>
